<compile_context>
chip_gen: v7x
topology: tpu7x:2x2x1
jax: 0.10.0
libtpu: 0.0.40
codegen_flags: <defaults>
</compile_context>

<pallas_src>
import jax
import jax.numpy as jnp
from jax.experimental import pallas as pl
from jax.experimental.pallas import tpu as pltpu


def _fused_transh_kernel(s1_ref, s2_ref, idx_ref, w_ref, b_ref, hw_ref, re_ref,
                         out1_ref, out2_ref, rel_ref, wr_ref):
    # s1_ref, s2_ref : [Bt, S]  encoded sentences (batch tile)
    # idx_ref        : [Bt, 1]  int32 relation indices
    # w_ref          : [S, M]   linear weight, pre-transposed
    # b_ref          : [1, M]   linear bias
    # hw_ref         : [R, M]   hyperplane normal table
    # re_ref         : [R, M]   relation embedding table
    s1 = s1_ref[...]
    s2 = s2_ref[...]
    idx = idx_ref[...]                      # [Bt, 1] int32
    w = w_ref[...]
    b = b_ref[...]
    hw = hw_ref[...]
    re = re_ref[...]

    bt = idx.shape[0]
    r = hw.shape[0]

    # In-kernel embedding gather as an exact one-hot matmul (row select):
    # avoids separate XLA gather kernels and the HBM round-trip for w_r.
    iota_r = jax.lax.broadcasted_iota(jnp.int32, (bt, r), 1)
    one_hot = (idx == iota_r).astype(jnp.float32)                       # [Bt, R]
    w_r = jnp.dot(one_hot, hw, preferred_element_type=jnp.float32)      # [Bt, M]
    out_rel = jnp.dot(one_hot, re, preferred_element_type=jnp.float32)  # [Bt, M]

    # nn.Linear: h = x @ W^T + b (weight stored pre-transposed -> plain MXU matmul)
    h1 = jnp.dot(s1, w, preferred_element_type=jnp.float32) + b
    h2 = jnp.dot(s2, w, preferred_element_type=jnp.float32) + b

    # Hyperplane projection: out = h - (sum(w_r * h, -1, keepdim) * w_r)
    out1_ref[...] = h1 - jnp.sum(w_r * h1, axis=-1, keepdims=True) * w_r
    out2_ref[...] = h2 - jnp.sum(w_r * h2, axis=-1, keepdims=True) * w_r
    rel_ref[...] = out_rel
    wr_ref[...] = w_r


def transh_forward(sent1_enc, sent2_enc, relation_idx, w_t, b,
                   hyperplane_w, relation_embedding, *, batch_block=256):
    """Single fused Pallas call. Returns (out_sent1, out_sent2, out_relation, w_r)."""
    B, S = sent1_enc.shape
    M = w_t.shape[1]
    R = hyperplane_w.shape[0]

    idx2d = relation_idx.reshape(B, 1).astype(jnp.int32)
    b2d = b.reshape(1, M)

    out_shapes = tuple(jax.ShapeDtypeStruct((B, M), jnp.float32) for _ in range(4))
    operands = (sent1_enc, sent2_enc, idx2d, w_t, b2d, hyperplane_w, relation_embedding)

    if B <= batch_block:
        # Small batch: no grid at all — whole arrays resident in VMEM, single step.
        vmem = pl.BlockSpec(memory_space=pltpu.MemorySpace.VMEM)
        return pl.pallas_call(
            _fused_transh_kernel,
            out_shape=out_shapes,
            in_specs=[vmem] * 7,
            out_specs=(vmem,) * 4,
        )(*operands)

    # Large batch: tile over batch, mark the axis "parallel" (v7x megacore).
    # NOTE: on v7x re-derive batch_block against 64 MiB VMEM if S/M grow.
    bt = batch_block
    grid = (pl.cdiv(B, bt),)
    return pl.pallas_call(
        _fused_transh_kernel,
        out_shape=out_shapes,
        grid=grid,
        in_specs=[
            pl.BlockSpec((bt, S), lambda i: (i, 0)),
            pl.BlockSpec((bt, S), lambda i: (i, 0)),
            pl.BlockSpec((bt, 1), lambda i: (i, 0)),
            pl.BlockSpec((S, M), lambda i: (0, 0)),
            pl.BlockSpec((1, M), lambda i: (0, 0)),
            pl.BlockSpec((R, M), lambda i: (0, 0)),
            pl.BlockSpec((R, M), lambda i: (0, 0)),
        ],
        out_specs=(
            pl.BlockSpec((bt, M), lambda i: (i, 0)),
            pl.BlockSpec((bt, M), lambda i: (i, 0)),
            pl.BlockSpec((bt, M), lambda i: (i, 0)),
            pl.BlockSpec((bt, M), lambda i: (i, 0)),
        ),
        compiler_params=pltpu.CompilerParams(
            dimension_semantics=("parallel",)),
    )(*operands)


class SentenceTransHPallas:
    """JAX/Pallas re-implementation of SentenceTransH's forward math."""

    def __init__(self, sentence_embedding_dim, num_relation, mapped_embedding_dim,
                 key=jax.random.PRNGKey(0)):
        k1, k2, k3, k4 = jax.random.split(key, 4)
        S, M, R = sentence_embedding_dim, mapped_embedding_dim, num_relation
        # nn.Linear(S, M): weight [M, S], bias [M]; store weight transposed [S, M].
        bound = 1.0 / jnp.sqrt(S)
        self.sentence_w_t = jax.random.uniform(k1, (S, M), jnp.float32, -bound, bound)
        self.sentence_b = jax.random.uniform(k2, (M,), jnp.float32, -bound, bound)
        # nn.Embedding(R, M) tables (hyperplane normals + relation embeddings).
        self.hyperplane_w = jax.random.normal(k3, (R, M), jnp.float32)
        self.relation_embedding = jax.random.normal(k4, (R, M), jnp.float32)

    def __call__(self, sent1_enc, relation_idx, sent2_enc):
        # TODO(synk): the original module's string encoders (sentence_encoder /
        # relation_encoder) have no Pallas equivalent; their numeric outputs are
        # taken as inputs here.
        out1, out2, out_rel, w_r1 = transh_forward(
            sent1_enc, sent2_enc, relation_idx,
            self.sentence_w_t, self.sentence_b,
            self.hyperplane_w, self.relation_embedding)
        # Matches torch forward return: (out_sentence1, out_relation, out_sentence2, w_r1)
        return out1, out_rel, out2, w_r1


if __name__ == "__main__":
    B = 8      # batch of KB tuples
    S = 32     # sentence_embedding_dim
    M = 128    # mapped_embedding_dim
    R = 16     # num_relation

    key = jax.random.PRNGKey(0)
    k_model, k_s1, k_s2, k_rel = jax.random.split(key, 4)

    model = SentenceTransHPallas(S, R, M, key=k_model)

    sent1_enc = jax.random.normal(k_s1, (B, S), jnp.float32)
    sent2_enc = jax.random.normal(k_s2, (B, S), jnp.float32)
    relation_idx = jax.random.randint(k_rel, (B,), 0, R, jnp.int32)

    out1, out_rel, out2, w_r1 = model(sent1_enc, relation_idx, sent2_enc)
    jax.block_until_ready((out1, out_rel, out2, w_r1))

    # Pure-JAX reference of the full forward math.
    def ref_proj(sent_enc, w_r):
        h = sent_enc @ model.sentence_w_t + model.sentence_b
        return h - jnp.sum(w_r * h, axis=-1, keepdims=True) * w_r

    w_r_ref = model.hyperplane_w[relation_idx]
    rel_ref = model.relation_embedding[relation_idx]
    assert jnp.allclose(out1, ref_proj(sent1_enc, w_r_ref), atol=1e-5)
    assert jnp.allclose(out2, ref_proj(sent2_enc, w_r_ref), atol=1e-5)
    assert jnp.allclose(out_rel, rel_ref, atol=1e-6)
    assert jnp.allclose(w_r1, w_r_ref, atol=1e-6)
    assert out1.shape == (B, M) and out_rel.shape == (B, M) and w_r1.shape == (B, M)

    # Also exercise the batch-tiled ("parallel" grid) path with a forced small block.
    B2 = 16
    ka, kb, kc = jax.random.split(jax.random.PRNGKey(1), 3)
    s1b = jax.random.normal(ka, (B2, S), jnp.float32)
    s2b = jax.random.normal(kb, (B2, S), jnp.float32)
    ridxb = jax.random.randint(kc, (B2,), 0, R, jnp.int32)
    o1b, o2b, orelb, wrb = transh_forward(
        s1b, s2b, ridxb, model.sentence_w_t, model.sentence_b,
        model.hyperplane_w, model.relation_embedding, batch_block=8)
    jax.block_until_ready((o1b, o2b, orelb, wrb))
    wrb_ref = model.hyperplane_w[ridxb]
    assert jnp.allclose(o1b, ref_proj(s1b, wrb_ref), atol=1e-5)
    assert jnp.allclose(o2b, ref_proj(s2b, wrb_ref), atol=1e-5)
    assert jnp.allclose(orelb, model.relation_embedding[ridxb], atol=1e-6)
    assert jnp.allclose(wrb, wrb_ref, atol=1e-6)

    print("KERNEL_OK")
</pallas_src>

<mosaic_0001>
module attributes {stable_mosaic.version = 11 : i64} {
  func.func @_fused_transh_kernel(%arg0: memref<8x32xf32, #tpu.memory_space<vmem>>, %arg1: memref<8x32xf32, #tpu.memory_space<vmem>>, %arg2: memref<8x1xi32, #tpu.memory_space<vmem>>, %arg3: memref<32x128xf32, #tpu.memory_space<vmem>>, %arg4: memref<1x128xf32, #tpu.memory_space<vmem>>, %arg5: memref<16x128xf32, #tpu.memory_space<vmem>>, %arg6: memref<16x128xf32, #tpu.memory_space<vmem>>, %arg7: memref<8x128xf32, #tpu.memory_space<vmem>>, %arg8: memref<8x128xf32, #tpu.memory_space<vmem>>, %arg9: memref<8x128xf32, #tpu.memory_space<vmem>>, %arg10: memref<8x128xf32, #tpu.memory_space<vmem>>) attributes {dimension_semantics = [], scalar_prefetch = 0 : i64, scratch_operands = 0 : i64, tpu.core_type = #tpu.core_type<tc>} {
    %c0 = arith.constant 0 : index
    %c0_0 = arith.constant 0 : index
    %0 = vector.load %arg0[%c0, %c0_0] : memref<8x32xf32, #tpu.memory_space<vmem>>, vector<8x32xf32>
    %c0_1 = arith.constant 0 : index
    %c0_2 = arith.constant 0 : index
    %1 = vector.load %arg1[%c0_1, %c0_2] : memref<8x32xf32, #tpu.memory_space<vmem>>, vector<8x32xf32>
    %c0_3 = arith.constant 0 : index
    %c0_4 = arith.constant 0 : index
    %2 = vector.load %arg2[%c0_3, %c0_4] : memref<8x1xi32, #tpu.memory_space<vmem>>, vector<8x1xi32>
    %c0_5 = arith.constant 0 : index
    %c0_6 = arith.constant 0 : index
    %3 = vector.load %arg3[%c0_5, %c0_6] : memref<32x128xf32, #tpu.memory_space<vmem>>, vector<32x128xf32>
    %c0_7 = arith.constant 0 : index
    %c0_8 = arith.constant 0 : index
    %4 = vector.load %arg4[%c0_7, %c0_8] : memref<1x128xf32, #tpu.memory_space<vmem>>, vector<1x128xf32>
    %c0_9 = arith.constant 0 : index
    %c0_10 = arith.constant 0 : index
    %5 = vector.load %arg5[%c0_9, %c0_10] : memref<16x128xf32, #tpu.memory_space<vmem>>, vector<16x128xf32>
    %c0_11 = arith.constant 0 : index
    %c0_12 = arith.constant 0 : index
    %6 = vector.load %arg6[%c0_11, %c0_12] : memref<16x128xf32, #tpu.memory_space<vmem>>, vector<16x128xf32>
    %7 = tpu.iota {dimensions = array<i32: 1>} : vector<8x16xi32>
    %8 = vector.broadcast %2 : vector<8x1xi32> to vector<8x16xi32>
    %9 = arith.cmpi eq, %8, %7 : vector<8x16xi32>
    %10 = arith.extui %9 : vector<8x16xi1> to vector<8x16xi32>
    %11 = arith.sitofp %10 : vector<8x16xi32> to vector<8x16xf32>
    %cst = arith.constant dense<0.000000e+00> : vector<8x128xf32>
    %12 = tpu.matmul %11, %5, %cst {dimension_numbers = #tpu.dot_dimension_numbers<[1], [0], [0], [1], [0, 0, 1, 1], [], []>} : vector<8x16xf32>, vector<16x128xf32>, vector<8x128xf32> -> vector<8x128xf32>
    %cst_13 = arith.constant dense<0.000000e+00> : vector<8x128xf32>
    %13 = tpu.matmul %11, %6, %cst_13 {dimension_numbers = #tpu.dot_dimension_numbers<[1], [0], [0], [1], [0, 0, 1, 1], [], []>} : vector<8x16xf32>, vector<16x128xf32>, vector<8x128xf32> -> vector<8x128xf32>
    %cst_14 = arith.constant dense<0.000000e+00> : vector<8x128xf32>
    %14 = tpu.matmul %0, %3, %cst_14 {dimension_numbers = #tpu.dot_dimension_numbers<[1], [0], [0], [1], [0, 0, 1, 1], [], []>} : vector<8x32xf32>, vector<32x128xf32>, vector<8x128xf32> -> vector<8x128xf32>
    %15 = vector.broadcast %4 : vector<1x128xf32> to vector<8x128xf32>
    %16 = arith.addf %14, %15 : vector<8x128xf32>
    %cst_15 = arith.constant dense<0.000000e+00> : vector<8x128xf32>
    %17 = tpu.matmul %1, %3, %cst_15 {dimension_numbers = #tpu.dot_dimension_numbers<[1], [0], [0], [1], [0, 0, 1, 1], [], []>} : vector<8x32xf32>, vector<32x128xf32>, vector<8x128xf32> -> vector<8x128xf32>
    %18 = vector.broadcast %4 : vector<1x128xf32> to vector<8x128xf32>
    %19 = arith.addf %17, %18 : vector<8x128xf32>
    %20 = arith.mulf %12, %16 : vector<8x128xf32>
    %cst_16 = arith.constant dense<0.000000e+00> : vector<8xf32>
    %21 = vector.multi_reduction <add>, %20, %cst_16 [1] : vector<8x128xf32> to vector<8xf32>
    %22 = vector.shape_cast %21 : vector<8xf32> to vector<8x1xf32>
    %23 = vector.broadcast %22 : vector<8x1xf32> to vector<8x128xf32>
    %24 = arith.mulf %23, %12 : vector<8x128xf32>
    %25 = arith.subf %16, %24 : vector<8x128xf32>
    %c0_17 = arith.constant 0 : index
    %c0_18 = arith.constant 0 : index
    %26 = vector.load %arg7[%c0_17, %c0_18] : memref<8x128xf32, #tpu.memory_space<vmem>>, vector<8x128xf32>
    tpu.vector_store %arg7[%c0_17, %c0_18], %25 {strides = array<i32>} : memref<8x128xf32, #tpu.memory_space<vmem>>, vector<8x128xf32>,
    %27 = arith.mulf %12, %19 : vector<8x128xf32>
    %cst_19 = arith.constant dense<0.000000e+00> : vector<8xf32>
    %28 = vector.multi_reduction <add>, %27, %cst_19 [1] : vector<8x128xf32> to vector<8xf32>
    %29 = vector.shape_cast %28 : vector<8xf32> to vector<8x1xf32>
    %30 = vector.broadcast %29 : vector<8x1xf32> to vector<8x128xf32>
    %31 = arith.mulf %30, %12 : vector<8x128xf32>
    %32 = arith.subf %19, %31 : vector<8x128xf32>
    %c0_20 = arith.constant 0 : index
    %c0_21 = arith.constant 0 : index
    %33 = vector.load %arg8[%c0_20, %c0_21] : memref<8x128xf32, #tpu.memory_space<vmem>>, vector<8x128xf32>
    tpu.vector_store %arg8[%c0_20, %c0_21], %32 {strides = array<i32>} : memref<8x128xf32, #tpu.memory_space<vmem>>, vector<8x128xf32>,
    %c0_22 = arith.constant 0 : index
    %c0_23 = arith.constant 0 : index
    %34 = vector.load %arg9[%c0_22, %c0_23] : memref<8x128xf32, #tpu.memory_space<vmem>>, vector<8x128xf32>
    tpu.vector_store %arg9[%c0_22, %c0_23], %13 {strides = array<i32>} : memref<8x128xf32, #tpu.memory_space<vmem>>, vector<8x128xf32>,
    %c0_24 = arith.constant 0 : index
    %c0_25 = arith.constant 0 : index
    %35 = vector.load %arg10[%c0_24, %c0_25] : memref<8x128xf32, #tpu.memory_space<vmem>>, vector<8x128xf32>
    tpu.vector_store %arg10[%c0_24, %c0_25], %12 {strides = array<i32>} : memref<8x128xf32, #tpu.memory_space<vmem>>, vector<8x128xf32>,
    return
  }
}

</mosaic_0001>

<llo_original>
// kernel: tpu_custom_call.1
$region0: #{tpu_custom_call.1}
  #allocation0 [shape = 'u32[]', space=smem, size = 0x4, offset = 0x4, fixed_abs, tag = 'smem constant byte address 0x4 - core index']
  #allocation1 [shape = 'u32[144,128]{1,0:T(1,128)}', space=vmem, size = 0x12000, scoped, tag = 'internal scratch']
  %s0 = inlined_call_operand.vmem [shape: f32[8,32], index: 0, kind: input, shape index: {}]
  %s1 = inlined_call_operand.hbm [shape: f32[8,32], index: 1, kind: input, shape index: {}]
  %s2 = inlined_call_operand.vmem [shape: s32[8,1], index: 2, kind: input, shape index: {}]
  %s3 = inlined_call_operand.hbm [shape: f32[32,128], index: 3, kind: input, shape index: {}]
  %s4 = inlined_call_operand.vmem [shape: f32[1,128], index: 4, kind: input, shape index: {}]
  %s5 = inlined_call_operand.vmem [shape: f32[16,128], index: 5, kind: input, shape index: {}]
  %s6 = inlined_call_operand.hbm [shape: f32[16,128], index: 6, kind: input, shape index: {}]
  %s7 = inlined_call_operand.hbm [shape: f32[8,128], index: 7, kind: output, shape index: {0}]
  %s8 = inlined_call_operand.hbm [shape: f32[8,128], index: 8, kind: output, shape index: {1}]
  %s9 = inlined_call_operand.hbm [shape: f32[8,128], index: 9, kind: output, shape index: {2}]
  %s10 = inlined_call_operand.hbm [shape: f32[8,128], index: 10, kind: output, shape index: {3}]
  %11 = xla_tuple %s7, %s8, %s9, %s10
  %s12 = sld [smem:[#allocation0]]
  $region74: #{tpu_custom_call.1} parent=0
    _
  %s14 = ssub.s32 1, %s12
  %s15 = scalar_select 0, %s14, %s12
  $region1: #{tpu_custom_call.1} parent=0
    #allocation2 [shape = 'u8[4096]{0}', space=vmem, size = 0x1000, scoped, tag = 'input window, operand 1, single buffered']
    #allocation3 [shape = 's32[1]{0}', space=sflag, size = 0x4, scoped, tag = 'scoped memory for tpu_custom_call.1']
    #allocation4 [shape = 's32[1]{0}', space=sflag, size = 0x4, scoped, tag = 'scoped memory for tpu_custom_call.1']
    #allocation5 [shape = 'u8[16384]{0}', space=vmem, size = 0x4000, scoped, tag = 'input window, operand 3, single buffered']
    #allocation6 [shape = 's32[1]{0}', space=sflag, size = 0x4, scoped, tag = 'scoped memory for tpu_custom_call.1']
    #allocation7 [shape = 'u8[8192]{0}', space=vmem, size = 0x2000, scoped, tag = 'input window, operand 6, single buffered']
    #allocation8 [shape = 'u8[4096]{0}', space=vmem, size = 0x1000, scoped, tag = 'output window, operand 0, single buffered']
    #allocation9 [shape = 'u8[4096]{0}', space=vmem, size = 0x1000, scoped, tag = 'output window, operand 1, single buffered']
    #allocation10 [shape = 's32[1]{0}', space=sflag, size = 0x4, scoped, tag = 'scoped memory for tpu_custom_call.1']
    #allocation11 [shape = 'u8[4096]{0}', space=vmem, size = 0x1000, scoped, tag = 'output window, operand 2, single buffered']
    #allocation12 [shape = 'u8[4096]{0}', space=vmem, size = 0x1000, scoped, tag = 'output window, operand 3, single buffered']
    #allocation13 [shape = 's32[1]{0}', space=sflag, size = 0x4, scoped, tag = 'scoped memory for tpu_custom_call.1']
    %16 = vsyncpa [#allocation3], 0
    %17 = vsyncpa [#allocation6], 0
    %18 = vsyncpa [#allocation4], 0
    %19 = vsyncpa [#allocation10], 0
    %20 = vsyncpa [#allocation13], 0
    // Predicated region
    $region2: #{tpu_custom_call.1} parent=1 // pred_check
      _
    $region3: #{tpu_custom_call.1} parent=1 // pred_check_branch
      %22 = sbr.rel (0) target = $region5
    $region4: #{tpu_custom_call.1} parent=1 // pred_region
      _
    $region5: #{tpu_custom_call.1} parent=1 // pred_fallthru
      _
    // Predicated region
    $region6: #{tpu_custom_call.1} parent=1 // pred_check
      _
    $region7: #{tpu_custom_call.1} parent=1 // pred_check_branch
      %24 = sbr.rel (0) target = $region9
    $region8: #{tpu_custom_call.1} parent=1 // pred_region
      %s26 = ssub.s32 128, 128
      %27 = vsyncadd [#allocation3], %s26
      %s29 = sshll.u32 [#allocation2], 4
      %s30 = int_to_ptr.vmem [resolvable:$true] %s29
      %32 = dma.hbm_to_vmem [thread:$0]  %s1, 128, %s30, [#allocation3]
    $region9: #{tpu_custom_call.1} parent=1 // pred_fallthru
      _
    // Predicated region
    $region10: #{tpu_custom_call.1} parent=1 // pred_check
      _
    $region11: #{tpu_custom_call.1} parent=1 // pred_check_branch
      %34 = sbr.rel (0) target = $region13
    $region12: #{tpu_custom_call.1} parent=1 // pred_region
      _
    $region13: #{tpu_custom_call.1} parent=1 // pred_fallthru
      _
    // Predicated region
    $region14: #{tpu_custom_call.1} parent=1 // pred_check
      _
    $region15: #{tpu_custom_call.1} parent=1 // pred_check_branch
      %36 = sbr.rel (0) target = $region17
    $region16: #{tpu_custom_call.1} parent=1 // pred_region
      %s38 = ssub.s32 512, 512
      %39 = vsyncadd [#allocation6], %s38
      %s40 = sshll.u32 [#allocation5], 4
      %s41 = int_to_ptr.vmem [resolvable:$true] %s40
      %46 = dma.hbm_to_vmem [thread:$0]  %s3, 512, %s41, [#allocation6], 128, 128, 8
    $region17: #{tpu_custom_call.1} parent=1 // pred_fallthru
      _
    // Predicated region
    $region18: #{tpu_custom_call.1} parent=1 // pred_check
      _
    $region19: #{tpu_custom_call.1} parent=1 // pred_check_branch
      %48 = sbr.rel (0) target = $region21
    $region20: #{tpu_custom_call.1} parent=1 // pred_region
      _
    $region21: #{tpu_custom_call.1} parent=1 // pred_fallthru
      _
    // Predicated region
    $region22: #{tpu_custom_call.1} parent=1 // pred_check
      _
    $region23: #{tpu_custom_call.1} parent=1 // pred_check_branch
      %50 = sbr.rel (0) target = $region25
    $region24: #{tpu_custom_call.1} parent=1 // pred_region
      _
    $region25: #{tpu_custom_call.1} parent=1 // pred_fallthru
      _
    // Predicated region
    $region26: #{tpu_custom_call.1} parent=1 // pred_check
      _
    $region27: #{tpu_custom_call.1} parent=1 // pred_check_branch
      %52 = sbr.rel (0) target = $region29
    $region28: #{tpu_custom_call.1} parent=1 // pred_region
      %s54 = ssub.s32 256, 256
      %55 = vsyncadd [#allocation6], %s54
      %s56 = sshll.u32 [#allocation7], 4
      %s57 = int_to_ptr.vmem [resolvable:$true] %s56
      %62 = dma.hbm_to_vmem [thread:$0]  %s6, 256, %s57, [#allocation6], 128, 128, 8
    $region29: #{tpu_custom_call.1} parent=1 // pred_fallthru
      _
    // Predicated region
    $region30: #{tpu_custom_call.1} parent=1 // pred_check
      _
    $region31: #{tpu_custom_call.1} parent=1 // pred_check_branch
      %64 = sbr.rel (0) target = $region33
    $region32: #{tpu_custom_call.1} parent=1 // pred_region
      %65 = dma.done [#allocation3], 128
    $region33: #{tpu_custom_call.1} parent=1 // pred_fallthru
      _
    // Predicated region
    $region34: #{tpu_custom_call.1} parent=1 // pred_check
      _
    $region35: #{tpu_custom_call.1} parent=1 // pred_check_branch
      %67 = sbr.rel (0) target = $region37
    $region36: #{tpu_custom_call.1} parent=1 // pred_region
      %68 = dma.done [#allocation6], 512
    $region37: #{tpu_custom_call.1} parent=1 // pred_fallthru
      _
    // Predicated region
    $region38: #{tpu_custom_call.1} parent=1 // pred_check
      _
    $region39: #{tpu_custom_call.1} parent=1 // pred_check_branch
      %70 = sbr.rel (0) target = $region41
    $region40: #{tpu_custom_call.1} parent=1 // pred_region
      %71 = dma.done [#allocation6], 256
    $region41: #{tpu_custom_call.1} parent=1 // pred_fallthru
      _
    %v72 = vld [vmem:[%s0] sm:$0xff]
    %v73 = vld [vmem:[#allocation2] sm:$0xff]
    %v74 = vld [vmem:[%s2] sm:$0xff]
    %v75 = vld [vmem:[#allocation5] sm:$0xff]
    %v76 = vld [vmem:[#allocation5 + $0x8] sm:$0xff]
    %v77 = vld [vmem:[#allocation5 + $0x10] sm:$0xff]
    %v78 = vld [vmem:[#allocation5 + $0x18] sm:$0xff]
    %v79 = vld [vmem:[%s4] sm:$0x1]
    %v80 = vld [vmem:[%s5] sm:$0xff]
    %v81 = vld [vmem:[%s5 + $0x8] sm:$0xff]
    %v82 = vld [vmem:[#allocation7] sm:$0xff]
    %v83 = vld [vmem:[#allocation7 + $0x8] sm:$0xff]
    %v84 = vlaneseq
    %v85 = vand.u32 %v84, 127
    %86 = vset.pattern.permute.xlu0 0
    %87 = vperm.xlu0 %86, %v74
    %v88 = vpop.permute.xlu0 %87
    %vm89 = vcmp.eq.s32.totalorder %v88, %v85
    %v90 = vsel %vm89, 1, 0
    %v91 = vcvt.s32.f32 %v90
    %vm92 = vcmask 130048
    %v94 = vsel %vm92, %v91, 0
    %96 = vmatprep.subr.mxu0 0.0
    %97 = vmatpush1.msra.mxu0 %v80
    %98 = vmatprep.subr.mxu0 0.0
    %99 = vmatpush1.msra.mxu0 %v81
    %100 = vmatprep.subr.mxu0 0.0
    %101 = vmatpush1.msra.mxu0 0.0
    %102 = vmatprep.subr.mxu0 0.0
    %103 = vmatpush1.msra.mxu0 0.0
    %104 = vmatprep.subr.mxu0 0.0
    %105 = vmatpush1.msra.mxu0 0.0
    %106 = vmatprep.subr.mxu0 0.0
    %107 = vmatpush1.msra.mxu0 0.0
    %108 = vmatprep.subr.mxu0 0.0
    %109 = vmatpush1.msra.mxu0 0.0
    %110 = vmatprep.subr.mxu0 0.0
    %111 = vmatpush1.msra.mxu0 0.0
    %112 = vmatprep.subr.mxu0 0.0
    %113 = vmatpush1.msra.mxu0 0.0
    %114 = vmatprep.subr.mxu0 0.0
    %115 = vmatpush1.msra.mxu0 0.0
    %116 = vmatprep.subr.mxu0 0.0
    %117 = vmatpush1.msra.mxu0 0.0
    %118 = vmatprep.subr.mxu0 0.0
    %119 = vmatpush1.msra.mxu0 0.0
    %120 = vmatprep.subr.mxu0 0.0
    %121 = vmatpush1.msra.mxu0 0.0
    %122 = vmatprep.subr.mxu0 0.0
    %123 = vmatpush1.msra.mxu0 0.0
    %124 = vmatprep.subr.mxu0 0.0
    %125 = vmatpush1.msra.mxu0 0.0
    %126 = vmatprep.subr.mxu0 0.0
    %127 = vmatpush1.msra.mxu0 0.0
    %128 = vmatprep.subr.mxu0 0.0
    %129 = vmatpush1.msra.mxu0 0.0
    %130 = vmatprep.subr.mxu0 0.0
    %131 = vmatpush1.msra.mxu0 0.0
    %132 = vmatprep.subr.mxu0 0.0
    %133 = vmatpush1.msra.mxu0 0.0
    %134 = vmatprep.subr.mxu0 0.0
    %135 = vmatpush1.msra.mxu0 0.0
    %136 = vmatprep.subr.mxu0 0.0
    %137 = vmatpush1.msra.mxu0 0.0
    %138 = vmatprep.subr.mxu0 0.0
    %139 = vmatpush1.msra.mxu0 0.0
    %140 = vmatprep.subr.mxu0 0.0
    %141 = vmatpush1.msra.mxu0 0.0
    %142 = vmatprep.subr.mxu0 0.0
    %143 = vmatpush1.msra.mxu0 0.0
    %144 = vmatprep.subr.mxu0 0.0
    %145 = vmatpush1.msra.mxu0 0.0
    %146 = vmatprep.subr.mxu0 0.0
    %147 = vmatpush1.msra.mxu0 0.0
    %148 = vmatprep.subr.mxu0 0.0
    %149 = vmatpush1.msra.mxu0 0.0
    %150 = vmatprep.subr.mxu0 0.0
    %151 = vmatpush1.msra.mxu0 0.0
    %152 = vmatprep.subr.mxu0 0.0
    %153 = vmatpush1.msra.mxu0 0.0
    %154 = vmatprep.subr.mxu0 0.0
    %155 = vmatpush1.msra.mxu0 0.0
    %156 = vmatprep.subr.mxu0 0.0
    %157 = vmatpush1.msra.mxu0 0.0
    %158 = vmatprep.subr.mxu0 0.0
    %159 = vmatpush1.msra.mxu0 0.0
    %160 = vmatprep.mubr.f32.mxu0 0.0
    %161 = vmatmul.mubr.f32.gmra.mrb[0].mxu0 %v94
    %v162 = vpop.f32.mrb[0].mxu0
    %v163 = vadd.f32 0.0, %v162
    %v164 = vpop.f32.mrb[0].mxu0
    %165 = vdwg.mxu0
    %166 = vmatprep.subr.mxu0 0.0
    %167 = vmatpush1.msra.mxu0 %v82
    %168 = vmatprep.subr.mxu0 0.0
    %169 = vmatpush1.msra.mxu0 %v83
    %170 = vmatprep.subr.mxu0 0.0
    %171 = vmatpush1.msra.mxu0 0.0
    %172 = vmatprep.subr.mxu0 0.0
    %173 = vmatpush1.msra.mxu0 0.0
    %174 = vmatprep.subr.mxu0 0.0
    %175 = vmatpush1.msra.mxu0 0.0
    %176 = vmatprep.subr.mxu0 0.0
    %177 = vmatpush1.msra.mxu0 0.0
    %178 = vmatprep.subr.mxu0 0.0
    %179 = vmatpush1.msra.mxu0 0.0
    %180 = vmatprep.subr.mxu0 0.0
    %181 = vmatpush1.msra.mxu0 0.0
    %182 = vmatprep.subr.mxu0 0.0
    %183 = vmatpush1.msra.mxu0 0.0
    %184 = vmatprep.subr.mxu0 0.0
    %185 = vmatpush1.msra.mxu0 0.0
    %186 = vmatprep.subr.mxu0 0.0
    %187 = vmatpush1.msra.mxu0 0.0
    %188 = vmatprep.subr.mxu0 0.0
    %189 = vmatpush1.msra.mxu0 0.0
    %190 = vmatprep.subr.mxu0 0.0
    %191 = vmatpush1.msra.mxu0 0.0
    %192 = vmatprep.subr.mxu0 0.0
    %193 = vmatpush1.msra.mxu0 0.0
    %194 = vmatprep.subr.mxu0 0.0
    %195 = vmatpush1.msra.mxu0 0.0
    %196 = vmatprep.subr.mxu0 0.0
    %197 = vmatpush1.msra.mxu0 0.0
    %198 = vmatprep.subr.mxu0 0.0
    %199 = vmatpush1.msra.mxu0 0.0
    %200 = vmatprep.subr.mxu0 0.0
    %201 = vmatpush1.msra.mxu0 0.0
    %202 = vmatprep.subr.mxu0 0.0
    %203 = vmatpush1.msra.mxu0 0.0
    %204 = vmatprep.subr.mxu0 0.0
    %205 = vmatpush1.msra.mxu0 0.0
    %206 = vmatprep.subr.mxu0 0.0
    %207 = vmatpush1.msra.mxu0 0.0
    %208 = vmatprep.subr.mxu0 0.0
    %209 = vmatpush1.msra.mxu0 0.0
    %210 = vmatprep.subr.mxu0 0.0
    %211 = vmatpush1.msra.mxu0 0.0
    %212 = vmatprep.subr.mxu0 0.0
    %213 = vmatpush1.msra.mxu0 0.0
    %214 = vmatprep.subr.mxu0 0.0
    %215 = vmatpush1.msra.mxu0 0.0
    %216 = vmatprep.subr.mxu0 0.0
    %217 = vmatpush1.msra.mxu0 0.0
    %218 = vmatprep.subr.mxu0 0.0
    %219 = vmatpush1.msra.mxu0 0.0
    %220 = vmatprep.subr.mxu0 0.0
    %221 = vmatpush1.msra.mxu0 0.0
    %222 = vmatprep.subr.mxu0 0.0
    %223 = vmatpush1.msra.mxu0 0.0
    %224 = vmatprep.subr.mxu0 0.0
    %225 = vmatpush1.msra.mxu0 0.0
    %226 = vmatprep.subr.mxu0 0.0
    %227 = vmatpush1.msra.mxu0 0.0
    %228 = vmatprep.subr.mxu0 0.0
    %229 = vmatpush1.msra.mxu0 0.0
    %230 = vmatprep.mubr.f32.mxu0 0.0
    %231 = vmatmul.mubr.f32.gmra.mrb[0].mxu0 %v94
    %v232 = vpop.f32.mrb[0].mxu0
    %v233 = vadd.f32 0.0, %v232
    %v234 = vpop.f32.mrb[0].mxu0
    %235 = vdwg.mxu0
    %v237 = vlaneseq
    %v238 = vshrl.u32 %v237, 7
    %v239 = vsub.s32 0, %v238
    %v240 = vrot.slane %v79, %v239
    %vm242 = vcmask 261120
    %v244 = vsel %vm242, %v72, 0
    %246 = vmatprep.subr.mxu0 0.0
    %247 = vmatpush1.msra.mxu0 %v75
    %248 = vmatprep.subr.mxu0 0.0
    %249 = vmatpush1.msra.mxu0 %v76
    %250 = vmatprep.subr.mxu0 0.0
    %251 = vmatpush1.msra.mxu0 %v77
    %252 = vmatprep.subr.mxu0 0.0
    %253 = vmatpush1.msra.mxu0 %v78
    %254 = vmatprep.subr.mxu0 0.0
    %255 = vmatpush1.msra.mxu0 0.0
    %256 = vmatprep.subr.mxu0 0.0
    %257 = vmatpush1.msra.mxu0 0.0
    %258 = vmatprep.subr.mxu0 0.0
    %259 = vmatpush1.msra.mxu0 0.0
    %260 = vmatprep.subr.mxu0 0.0
    %261 = vmatpush1.msra.mxu0 0.0
    %262 = vmatprep.subr.mxu0 0.0
    %263 = vmatpush1.msra.mxu0 0.0
    %264 = vmatprep.subr.mxu0 0.0
    %265 = vmatpush1.msra.mxu0 0.0
    %266 = vmatprep.subr.mxu0 0.0
    %267 = vmatpush1.msra.mxu0 0.0
    %268 = vmatprep.subr.mxu0 0.0
    %269 = vmatpush1.msra.mxu0 0.0
    %270 = vmatprep.subr.mxu0 0.0
    %271 = vmatpush1.msra.mxu0 0.0
    %272 = vmatprep.subr.mxu0 0.0
    %273 = vmatpush1.msra.mxu0 0.0
    %274 = vmatprep.subr.mxu0 0.0
    %275 = vmatpush1.msra.mxu0 0.0
    %276 = vmatprep.subr.mxu0 0.0
    %277 = vmatpush1.msra.mxu0 0.0
    %278 = vmatprep.subr.mxu0 0.0
    %279 = vmatpush1.msra.mxu0 0.0
    %280 = vmatprep.subr.mxu0 0.0
    %281 = vmatpush1.msra.mxu0 0.0
    %282 = vmatprep.subr.mxu0 0.0
    %283 = vmatpush1.msra.mxu0 0.0
    %284 = vmatprep.subr.mxu0 0.0
    %285 = vmatpush1.msra.mxu0 0.0
    %286 = vmatprep.subr.mxu0 0.0
    %287 = vmatpush1.msra.mxu0 0.0
    %288 = vmatprep.subr.mxu0 0.0
    %289 = vmatpush1.msra.mxu0 0.0
    %290 = vmatprep.subr.mxu0 0.0
    %291 = vmatpush1.msra.mxu0 0.0
    %292 = vmatprep.subr.mxu0 0.0
    %293 = vmatpush1.msra.mxu0 0.0
    %294 = vmatprep.subr.mxu0 0.0
    %295 = vmatpush1.msra.mxu0 0.0
    %296 = vmatprep.subr.mxu0 0.0
    %297 = vmatpush1.msra.mxu0 0.0
    %298 = vmatprep.subr.mxu0 0.0
    %299 = vmatpush1.msra.mxu0 0.0
    %300 = vmatprep.subr.mxu0 0.0
    %301 = vmatpush1.msra.mxu0 0.0
    %302 = vmatprep.subr.mxu0 0.0
    %303 = vmatpush1.msra.mxu0 0.0
    %304 = vmatprep.subr.mxu0 0.0
    %305 = vmatpush1.msra.mxu0 0.0
    %306 = vmatprep.subr.mxu0 0.0
    %307 = vmatpush1.msra.mxu0 0.0
    %308 = vmatprep.subr.mxu0 0.0
    %309 = vmatpush1.msra.mxu0 0.0
    %310 = vmatprep.mubr.f32.mxu0 0.0
    %311 = vmatmul.mubr.f32.gmra.mrb[0].mxu0 %v244
    %v312 = vpop.f32.mrb[0].mxu0
    %v313 = vadd.f32 %v240, %v312
    %v314 = vpop.f32.mrb[0].mxu0
    %315 = vdwg.mxu0
    %v317 = vsel %vm242, %v73, 0
    %319 = vmatprep.subr.mxu0 0.0
    %320 = vmatpush1.msra.mxu0 %v75
    %321 = vmatprep.subr.mxu0 0.0
    %322 = vmatpush1.msra.mxu0 %v76
    %323 = vmatprep.subr.mxu0 0.0
    %324 = vmatpush1.msra.mxu0 %v77
    %325 = vmatprep.subr.mxu0 0.0
    %326 = vmatpush1.msra.mxu0 %v78
    %327 = vmatprep.subr.mxu0 0.0
    %328 = vmatpush1.msra.mxu0 0.0
    %329 = vmatprep.subr.mxu0 0.0
    %330 = vmatpush1.msra.mxu0 0.0
    %331 = vmatprep.subr.mxu0 0.0
    %332 = vmatpush1.msra.mxu0 0.0
    %333 = vmatprep.subr.mxu0 0.0
    %334 = vmatpush1.msra.mxu0 0.0
    %335 = vmatprep.subr.mxu0 0.0
    %336 = vmatpush1.msra.mxu0 0.0
    %337 = vmatprep.subr.mxu0 0.0
    %338 = vmatpush1.msra.mxu0 0.0
    %339 = vmatprep.subr.mxu0 0.0
    %340 = vmatpush1.msra.mxu0 0.0
    %341 = vmatprep.subr.mxu0 0.0
    %342 = vmatpush1.msra.mxu0 0.0
    %343 = vmatprep.subr.mxu0 0.0
    %344 = vmatpush1.msra.mxu0 0.0
    %345 = vmatprep.subr.mxu0 0.0
    %346 = vmatpush1.msra.mxu0 0.0
    %347 = vmatprep.subr.mxu0 0.0
    %348 = vmatpush1.msra.mxu0 0.0
    %349 = vmatprep.subr.mxu0 0.0
    %350 = vmatpush1.msra.mxu0 0.0
    %351 = vmatprep.subr.mxu0 0.0
    %352 = vmatpush1.msra.mxu0 0.0
    %353 = vmatprep.subr.mxu0 0.0
    %354 = vmatpush1.msra.mxu0 0.0
    %355 = vmatprep.subr.mxu0 0.0
    %356 = vmatpush1.msra.mxu0 0.0
    %357 = vmatprep.subr.mxu0 0.0
    %358 = vmatpush1.msra.mxu0 0.0
    %359 = vmatprep.subr.mxu0 0.0
    %360 = vmatpush1.msra.mxu0 0.0
    %361 = vmatprep.subr.mxu0 0.0
    %362 = vmatpush1.msra.mxu0 0.0
    %363 = vmatprep.subr.mxu0 0.0
    %364 = vmatpush1.msra.mxu0 0.0
    %365 = vmatprep.subr.mxu0 0.0
    %366 = vmatpush1.msra.mxu0 0.0
    %367 = vmatprep.subr.mxu0 0.0
    %368 = vmatpush1.msra.mxu0 0.0
    %369 = vmatprep.subr.mxu0 0.0
    %370 = vmatpush1.msra.mxu0 0.0
    %371 = vmatprep.subr.mxu0 0.0
    %372 = vmatpush1.msra.mxu0 0.0
    %373 = vmatprep.subr.mxu0 0.0
    %374 = vmatpush1.msra.mxu0 0.0
    %375 = vmatprep.subr.mxu0 0.0
    %376 = vmatpush1.msra.mxu0 0.0
    %377 = vmatprep.subr.mxu0 0.0
    %378 = vmatpush1.msra.mxu0 0.0
    %379 = vmatprep.subr.mxu0 0.0
    %380 = vmatpush1.msra.mxu0 0.0
    %381 = vmatprep.subr.mxu0 0.0
    %382 = vmatpush1.msra.mxu0 0.0
    %383 = vmatprep.mubr.f32.mxu0 0.0
    %384 = vmatmul.mubr.f32.gmra.mrb[0].mxu0 %v317
    %v385 = vpop.f32.mrb[0].mxu0
    %v386 = vadd.f32 %v240, %v385
    %v387 = vpop.f32.mrb[0].mxu0
    %388 = vdwg.mxu0
    %v389 = vmul.f32 %v163, %v313
    %390 = vadd.xlane.f32.xlu0 %v389
    %v391 = vpop.xlane.xlu0 %390
    %v392 = vmul.f32 %v391, %v163
    %v393 = vsub.f32 %v313, %v392
    %394 = vst [vmem:[#allocation8] sm:$0xff] %v393
    %v395 = vmul.f32 %v163, %v386
    %396 = vadd.xlane.f32.xlu0 %v395
    %v397 = vpop.xlane.xlu0 %396
    %v398 = vmul.f32 %v397, %v163
    %v399 = vsub.f32 %v386, %v398
    %400 = vst [vmem:[#allocation9] sm:$0xff] %v399
    %401 = vst [vmem:[#allocation11] sm:$0xff] %v233
    %402 = vst [vmem:[#allocation12] sm:$0xff] %v163
    // Predicated region
    $region42: #{tpu_custom_call.1} parent=1 // pred_check
      _
    $region43: #{tpu_custom_call.1} parent=1 // pred_check_branch
      %404 = sbr.rel (0) target = $region45
    $region44: #{tpu_custom_call.1} parent=1 // pred_region
      %s406 = ssub.s32 128, 128
      %407 = vsyncadd [#allocation4], %s406
      %s409 = sshll.u32 [#allocation8], 4
      %s410 = int_to_ptr.vmem [resolvable:$true] %s409
      %412 = dma.vmem_to_hbm [thread:$0]  %s410, 128, %s7, [#allocation4]
    $region45: #{tpu_custom_call.1} parent=1 // pred_fallthru
      _
    // Predicated region
    $region46: #{tpu_custom_call.1} parent=1 // pred_check
      _
    $region47: #{tpu_custom_call.1} parent=1 // pred_check_branch
      %414 = sbr.rel (0) target = $region49
    $region48: #{tpu_custom_call.1} parent=1 // pred_region
      %s416 = ssub.s32 128, 128
      %417 = vsyncadd [#allocation10], %s416
      %s419 = sshll.u32 [#allocation9], 4
      %s420 = int_to_ptr.vmem [resolvable:$true] %s419
      %422 = dma.vmem_to_hbm [thread:$0]  %s420, 128, %s8, [#allocation10]
    $region49: #{tpu_custom_call.1} parent=1 // pred_fallthru
      _
    // Predicated region
    $region50: #{tpu_custom_call.1} parent=1 // pred_check
      _
    $region51: #{tpu_custom_call.1} parent=1 // pred_check_branch
      %424 = sbr.rel (0) target = $region53
    $region52: #{tpu_custom_call.1} parent=1 // pred_region
      %s426 = ssub.s32 128, 128
      %427 = vsyncadd [#allocation10], %s426
      %s429 = sshll.u32 [#allocation11], 4
      %s430 = int_to_ptr.vmem [resolvable:$true] %s429
      %432 = dma.vmem_to_hbm [thread:$0]  %s430, 128, %s9, [#allocation10]
    $region53: #{tpu_custom_call.1} parent=1 // pred_fallthru
      _
    // Predicated region
    $region54: #{tpu_custom_call.1} parent=1 // pred_check
      _
    $region55: #{tpu_custom_call.1} parent=1 // pred_check_branch
      %434 = sbr.rel (0) target = $region57
    $region56: #{tpu_custom_call.1} parent=1 // pred_region
      %s436 = ssub.s32 128, 128
      %437 = vsyncadd [#allocation13], %s436
      %s439 = sshll.u32 [#allocation12], 4
      %s440 = int_to_ptr.vmem [resolvable:$true] %s439
      %442 = dma.vmem_to_hbm [thread:$0]  %s440, 128, %s10, [#allocation13]
    $region57: #{tpu_custom_call.1} parent=1 // pred_fallthru
      _
    // Predicated region
    $region58: #{tpu_custom_call.1} parent=1 // pred_check
      _
    $region59: #{tpu_custom_call.1} parent=1 // pred_check_branch
      %444 = sbr.rel (0) target = $region61
    $region60: #{tpu_custom_call.1} parent=1 // pred_region
      %445 = dma.done [#allocation4], 128
    $region61: #{tpu_custom_call.1} parent=1 // pred_fallthru
      _
    // Predicated region
    $region62: #{tpu_custom_call.1} parent=1 // pred_check
      _
    $region63: #{tpu_custom_call.1} parent=1 // pred_check_branch
      %447 = sbr.rel (0) target = $region65
    $region64: #{tpu_custom_call.1} parent=1 // pred_region
      %448 = dma.done [#allocation10], 128
    $region65: #{tpu_custom_call.1} parent=1 // pred_fallthru
      _
    // Predicated region
    $region66: #{tpu_custom_call.1} parent=1 // pred_check
      _
    $region67: #{tpu_custom_call.1} parent=1 // pred_check_branch
      %450 = sbr.rel (0) target = $region69
    $region68: #{tpu_custom_call.1} parent=1 // pred_region
      %451 = dma.done [#allocation10], 128
    $region69: #{tpu_custom_call.1} parent=1 // pred_fallthru
      _
    // Predicated region
    $region70: #{tpu_custom_call.1} parent=1 // pred_check
      _
    $region71: #{tpu_custom_call.1} parent=1 // pred_check_branch
      %453 = sbr.rel (0) target = $region73
    $region72: #{tpu_custom_call.1} parent=1 // pred_region
      %454 = dma.done [#allocation13], 128
    $region73: #{tpu_custom_call.1} parent=1 // pred_fallthru
      _
    %455 = vsyncpa [#allocation3], 1
    %456 = vsyncpa [#allocation6], 1
    %457 = vsyncpa [#allocation4], 1
    %458 = vsyncpa [#allocation10], 1
    %459 = vsyncpa [#allocation13], 1

</llo_original>
